<compile_context>
chip_gen: v7x
topology: tpu7x:2x2x1
jax: 0.10.0
libtpu: 0.0.40
codegen_flags: <defaults>
</compile_context>

<pallas_src>
import functools

import jax
import jax.numpy as jnp
from jax.experimental import pallas as pl
from jax.experimental.pallas import tpu as pltpu


def _round_up(n, m):
    return ((n + m - 1) // m) * m


def detect_num_tensorcores():
    """Best-effort TensorCore count per chip (v7x=2, v5e/v6e=1). Safe fallback=1."""
    try:
        d = jax.devices()[0]
        for attr in ("num_cores", "core_count"):
            v = getattr(d, attr, None)
            if isinstance(v, int) and v > 0:
                return max(1, min(int(v), 4))
    except Exception:
        pass
    return 1


def _mlp_kernel(x_ref, w1_ref, b1_ref, w2_ref, b2_ref, w3_ref, b3_ref, o_ref):
    # NOTE: rows of the x tile beyond the true batch (partial final block) hold
    # undefined data; this is safe because every output row depends only on its
    # own input row and out-of-range rows are masked on the output store.
    xv = x_ref[...].astype(w1_ref.dtype)          # no-op in the f32 path
    # hidden_layer1 + ReLU (f32 accumulation on the MXU, f32 bias on the VPU)
    h1 = jnp.dot(xv, w1_ref[...], preferred_element_type=jnp.float32)
    h1 = jnp.maximum(h1 + b1_ref[...], 0.0)
    # hidden_layer2 + ReLU
    h2 = jnp.dot(h1.astype(w2_ref.dtype), w2_ref[...],
                 preferred_element_type=jnp.float32)
    h2 = jnp.maximum(h2 + b2_ref[...], 0.0)
    # output layer (no activation)
    out = jnp.dot(h2.astype(w3_ref.dtype), w3_ref[...],
                  preferred_element_type=jnp.float32) + b3_ref[...]
    o_ref[...] = out.astype(o_ref.dtype)


def prepare_params(params, use_bf16=False):
    """One-time padding / casting of weights (hoisted out of the forward pass).

    Weights are stored (in, out) == transpose of PyTorch's (out, in), so the
    kernel computes x @ W + b (identical to PyTorch's x @ W.T + b).
    Padded rows/cols are zero, so the math is unchanged; padded output columns
    are sliced off in chat_mlp_forward.
    """
    w1, b1 = params["w1"], params["b1"]
    w2, b2 = params["w2"], params["b2"]
    w3, b3 = params["w3"], params["b3"]

    hidden = w1.shape[1]
    num_classes = w3.shape[1]
    h_p = _round_up(hidden, 128)
    c_p = _round_up(num_classes, 128)

    w1p = jnp.pad(w1, ((0, 0), (0, h_p - hidden)))
    b1p = jnp.pad(b1, ((0, 0), (0, h_p - hidden)))
    w2p = jnp.pad(w2, ((0, h_p - hidden), (0, h_p - hidden)))
    b2p = jnp.pad(b2, ((0, 0), (0, h_p - hidden)))
    w3p = jnp.pad(w3, ((0, h_p - hidden), (0, c_p - num_classes)))
    b3p = jnp.pad(b3, ((0, 0), (0, c_p - num_classes)))

    cdt = jnp.bfloat16 if use_bf16 else w1.dtype   # biases stay f32 either way
    return {
        "w1": w1p.astype(cdt), "b1": b1p,
        "w2": w2p.astype(cdt), "b2": b2p,
        "w3": w3p.astype(cdt), "b3": b3p,
    }


@functools.partial(jax.jit, static_argnames=("num_classes", "num_splits"))
def chat_mlp_forward(x, prepared, num_classes, num_splits=1):
    """Forward pass of Chat_NeuralNetwork via a single Pallas kernel.

    x: (B, input_size) float32
    prepared: output of prepare_params()
    num_splits: grid steps over the batch (1 on v5e/v6e, #TensorCores on v7x)
    """
    w1, b1 = prepared["w1"], prepared["b1"]
    w2, b2 = prepared["w2"], prepared["b2"]
    w3, b3 = prepared["w3"], prepared["b3"]

    B, in_size = x.shape
    h_p = w1.shape[1]
    c_p = w3.shape[1]

    # Batch tile: one tile per requested grid split, rounded up to the sublane
    # multiple (16 for bf16 packing, 8 for f32).
    sub = 16 if w1.dtype == jnp.bfloat16 else 8
    bb = _round_up(pl.cdiv(B, max(1, num_splits)), sub)
    grid = (pl.cdiv(B, bb),)

    flops = 2 * B * (in_size * h_p + h_p * h_p + h_p * c_p)
    bytes_accessed = (
        int(x.size) * x.dtype.itemsize
        + sum(int(a.size) * a.dtype.itemsize for a in (w1, b1, w2, b2, w3, b3))
        + B * c_p * x.dtype.itemsize
    )

    out_padded = pl.pallas_call(
        _mlp_kernel,
        out_shape=jax.ShapeDtypeStruct((B, c_p), x.dtype),
        grid_spec=pltpu.PrefetchScalarGridSpec(
            num_scalar_prefetch=0,
            grid=grid,
            in_specs=[
                pl.BlockSpec((bb, in_size), lambda i: (i, 0)),   # x tile (unpadded K)
                pl.BlockSpec((in_size, h_p), lambda i: (0, 0)),  # w1 (resident)
                pl.BlockSpec((1, h_p), lambda i: (0, 0)),        # b1
                pl.BlockSpec((h_p, h_p), lambda i: (0, 0)),      # w2
                pl.BlockSpec((1, h_p), lambda i: (0, 0)),        # b2
                pl.BlockSpec((h_p, c_p), lambda i: (0, 0)),      # w3
                pl.BlockSpec((1, c_p), lambda i: (0, 0)),        # b3
            ],
            out_specs=pl.BlockSpec((bb, c_p), lambda i: (i, 0)),
        ),
        compiler_params=pltpu.CompilerParams(
            dimension_semantics=("parallel",),
        ),
        cost_estimate=pl.CostEstimate(
            flops=flops, transcendentals=0, bytes_accessed=bytes_accessed),
    )(x, w1, b1, w2, b2, w3, b3)

    # Drop the padded class columns (cheap slice; kernel output stays lane-dense).
    return out_padded[:, :num_classes]


def init_params(key, input_size, hidden_size, num_classes):
    """Deterministic init mimicking PyTorch nn.Linear default (U(-1/sqrt(fan_in), +))."""
    ks = jax.random.split(key, 6)

    def linear(kw, kb, fan_in, fan_out):
        bound = 1.0 / jnp.sqrt(jnp.float32(fan_in))
        # stored as (in, out) == transpose of PyTorch's (out, in) weight
        w = jax.random.uniform(kw, (fan_in, fan_out), jnp.float32, -bound, bound)
        b = jax.random.uniform(kb, (1, fan_out), jnp.float32, -bound, bound)
        return w, b

    w1, b1 = linear(ks[0], ks[1], input_size, hidden_size)
    w2, b2 = linear(ks[2], ks[3], hidden_size, hidden_size)
    w3, b3 = linear(ks[4], ks[5], hidden_size, num_classes)
    return {"w1": w1, "b1": b1, "w2": w2, "b2": b2, "w3": w3, "b3": b3}


def _reference(x, p):
    h1 = jnp.maximum(x @ p["w1"] + p["b1"], 0.0)
    h2 = jnp.maximum(h1 @ p["w2"] + p["b2"], 0.0)
    return h2 @ p["w3"] + p["b3"]


if __name__ == "__main__":
    key = jax.random.PRNGKey(0)
    k_x, k_p = jax.random.split(key)

    batch, input_size, hidden_size, num_classes = 64, 32, 64, 16
    x = jax.random.normal(k_x, (batch, input_size), jnp.float32)
    params = init_params(k_p, input_size, hidden_size, num_classes)
    ref = _reference(x, params)

    # 1 grid step on single-TC chips (v5e/v6e); one step per core on dual-TC v7x.
    n_splits = detect_num_tensorcores()

    # --- f32 path ---
    prepared_f32 = prepare_params(params, use_bf16=False)
    out = chat_mlp_forward(x, prepared_f32, num_classes=num_classes, num_splits=n_splits)
    jax.block_until_ready(out)
    assert out.shape == (batch, num_classes)
    assert jnp.allclose(out, ref, atol=1e-5, rtol=1e-5)

    # --- bf16 operand path (f32 accumulation, f32 biases); looser tolerance ---
    prepared_bf16 = prepare_params(params, use_bf16=True)
    out_bf16 = chat_mlp_forward(x, prepared_bf16, num_classes=num_classes, num_splits=n_splits)
    jax.block_until_ready(out_bf16)
    assert out_bf16.shape == (batch, num_classes)
    assert jnp.allclose(out_bf16, ref, atol=1e-1, rtol=1e-1)

    # --- ragged / small batch path (partial final block, clamped tile) ---
    x_small = jax.random.normal(k_x, (10, input_size), jnp.float32)
    out_small = chat_mlp_forward(x_small, prepared_f32, num_classes=num_classes, num_splits=1)
    jax.block_until_ready(out_small)
    assert jnp.allclose(out_small, _reference(x_small, params), atol=1e-5, rtol=1e-5)

    print("KERNEL_OK")
</pallas_src>

<mosaic_0001>
module attributes {stable_mosaic.version = 11 : i64} {
  func.func @_mlp_kernel(%arg0: i32, %arg1: memref<64x32xf32, #tpu.memory_space<vmem>>, %arg2: memref<32x128xf32, #tpu.memory_space<vmem>>, %arg3: memref<1x128xf32, #tpu.memory_space<vmem>>, %arg4: memref<128x128xf32, #tpu.memory_space<vmem>>, %arg5: memref<1x128xf32, #tpu.memory_space<vmem>>, %arg6: memref<128x128xf32, #tpu.memory_space<vmem>>, %arg7: memref<1x128xf32, #tpu.memory_space<vmem>>, %arg8: memref<64x128xf32, #tpu.memory_space<vmem>>) attributes {dimension_semantics = [#tpu.dimension_semantics<parallel>], iteration_bounds = array<i64: 1>, scalar_prefetch = 0 : i64, scratch_operands = 0 : i64, tpu.core_type = #tpu.core_type<tc>, window_params = [{transform_indices = @transform_0, window_bounds = array<i64: 64, 32>}, {pipeline_mode = #tpu.pipeline_mode<synchronous>, transform_indices = @transform_1, window_bounds = array<i64: 32, 128>}, {pipeline_mode = #tpu.pipeline_mode<synchronous>, transform_indices = @transform_2, window_bounds = array<i64: 1, 128>}, {pipeline_mode = #tpu.pipeline_mode<synchronous>, transform_indices = @transform_3, window_bounds = array<i64: 128, 128>}, {pipeline_mode = #tpu.pipeline_mode<synchronous>, transform_indices = @transform_4, window_bounds = array<i64: 1, 128>}, {pipeline_mode = #tpu.pipeline_mode<synchronous>, transform_indices = @transform_5, window_bounds = array<i64: 128, 128>}, {pipeline_mode = #tpu.pipeline_mode<synchronous>, transform_indices = @transform_6, window_bounds = array<i64: 1, 128>}, {transform_indices = @transform_7, window_bounds = array<i64: 64, 128>}]} {
    %c0 = arith.constant 0 : index
    %c0_0 = arith.constant 0 : index
    %0 = vector.load %arg1[%c0, %c0_0] : memref<64x32xf32, #tpu.memory_space<vmem>>, vector<64x32xf32>
    %c0_1 = arith.constant 0 : index
    %c0_2 = arith.constant 0 : index
    %1 = vector.load %arg2[%c0_1, %c0_2] : memref<32x128xf32, #tpu.memory_space<vmem>>, vector<32x128xf32>
    %cst = arith.constant dense<0.000000e+00> : vector<64x128xf32>
    %2 = tpu.matmul %0, %1, %cst {dimension_numbers = #tpu.dot_dimension_numbers<[1], [0], [0], [1], [0, 0, 1, 1], [], []>} : vector<64x32xf32>, vector<32x128xf32>, vector<64x128xf32> -> vector<64x128xf32>
    %c0_3 = arith.constant 0 : index
    %c0_4 = arith.constant 0 : index
    %3 = vector.load %arg3[%c0_3, %c0_4] : memref<1x128xf32, #tpu.memory_space<vmem>>, vector<1x128xf32>
    %4 = vector.broadcast %3 : vector<1x128xf32> to vector<64x128xf32>
    %5 = arith.addf %2, %4 : vector<64x128xf32>
    %cst_5 = arith.constant 0.000000e+00 : f32
    %6 = vector.broadcast %cst_5 : f32 to vector<64x128xf32>
    %7 = arith.maximumf %5, %6 : vector<64x128xf32>
    %c0_6 = arith.constant 0 : index
    %c0_7 = arith.constant 0 : index
    %8 = vector.load %arg4[%c0_6, %c0_7] : memref<128x128xf32, #tpu.memory_space<vmem>>, vector<128x128xf32>
    %cst_8 = arith.constant dense<0.000000e+00> : vector<64x128xf32>
    %9 = tpu.matmul %7, %8, %cst_8 {dimension_numbers = #tpu.dot_dimension_numbers<[1], [0], [0], [1], [0, 0, 1, 1], [], []>} : vector<64x128xf32>, vector<128x128xf32>, vector<64x128xf32> -> vector<64x128xf32>
    %c0_9 = arith.constant 0 : index
    %c0_10 = arith.constant 0 : index
    %10 = vector.load %arg5[%c0_9, %c0_10] : memref<1x128xf32, #tpu.memory_space<vmem>>, vector<1x128xf32>
    %11 = vector.broadcast %10 : vector<1x128xf32> to vector<64x128xf32>
    %12 = arith.addf %9, %11 : vector<64x128xf32>
    %cst_11 = arith.constant 0.000000e+00 : f32
    %13 = vector.broadcast %cst_11 : f32 to vector<64x128xf32>
    %14 = arith.maximumf %12, %13 : vector<64x128xf32>
    %c0_12 = arith.constant 0 : index
    %c0_13 = arith.constant 0 : index
    %15 = vector.load %arg6[%c0_12, %c0_13] : memref<128x128xf32, #tpu.memory_space<vmem>>, vector<128x128xf32>
    %cst_14 = arith.constant dense<0.000000e+00> : vector<64x128xf32>
    %16 = tpu.matmul %14, %15, %cst_14 {dimension_numbers = #tpu.dot_dimension_numbers<[1], [0], [0], [1], [0, 0, 1, 1], [], []>} : vector<64x128xf32>, vector<128x128xf32>, vector<64x128xf32> -> vector<64x128xf32>
    %c0_15 = arith.constant 0 : index
    %c0_16 = arith.constant 0 : index
    %17 = vector.load %arg7[%c0_15, %c0_16] : memref<1x128xf32, #tpu.memory_space<vmem>>, vector<1x128xf32>
    %18 = vector.broadcast %17 : vector<1x128xf32> to vector<64x128xf32>
    %19 = arith.addf %16, %18 : vector<64x128xf32>
    %c0_17 = arith.constant 0 : index
    %c0_18 = arith.constant 0 : index
    %20 = vector.load %arg8[%c0_17, %c0_18] : memref<64x128xf32, #tpu.memory_space<vmem>>, vector<64x128xf32>
    tpu.vector_store %arg8[%c0_17, %c0_18], %19 {strides = array<i32>} : memref<64x128xf32, #tpu.memory_space<vmem>>, vector<64x128xf32>,
    return
  }
  func.func @transform_0(%arg0: i32) -> (i32, i32) {
    %c0_i32 = arith.constant 0 : i32
    %c0_i32_0 = arith.constant 0 : i32
    return %arg0, %c0_i32 : i32, i32
  }
  func.func @transform_1(%arg0: i32) -> (i32, i32) {
    %c0_i32 = arith.constant 0 : i32
    %c0_i32_0 = arith.constant 0 : i32
    %c0_i32_1 = arith.constant 0 : i32
    return %c0_i32, %c0_i32_0 : i32, i32
  }
  func.func @transform_2(%arg0: i32) -> (i32, i32) {
    %c0_i32 = arith.constant 0 : i32
    %c0_i32_0 = arith.constant 0 : i32
    %c0_i32_1 = arith.constant 0 : i32
    return %c0_i32, %c0_i32_0 : i32, i32
  }
  func.func @transform_3(%arg0: i32) -> (i32, i32) {
    %c0_i32 = arith.constant 0 : i32
    %c0_i32_0 = arith.constant 0 : i32
    %c0_i32_1 = arith.constant 0 : i32
    return %c0_i32, %c0_i32_0 : i32, i32
  }
  func.func @transform_4(%arg0: i32) -> (i32, i32) {
    %c0_i32 = arith.constant 0 : i32
    %c0_i32_0 = arith.constant 0 : i32
    %c0_i32_1 = arith.constant 0 : i32
    return %c0_i32, %c0_i32_0 : i32, i32
  }
  func.func @transform_5(%arg0: i32) -> (i32, i32) {
    %c0_i32 = arith.constant 0 : i32
    %c0_i32_0 = arith.constant 0 : i32
    %c0_i32_1 = arith.constant 0 : i32
    return %c0_i32, %c0_i32_0 : i32, i32
  }
  func.func @transform_6(%arg0: i32) -> (i32, i32) {
    %c0_i32 = arith.constant 0 : i32
    %c0_i32_0 = arith.constant 0 : i32
    %c0_i32_1 = arith.constant 0 : i32
    return %c0_i32, %c0_i32_0 : i32, i32
  }
  func.func @transform_7(%arg0: i32) -> (i32, i32) {
    %c0_i32 = arith.constant 0 : i32
    %c0_i32_0 = arith.constant 0 : i32
    return %arg0, %c0_i32 : i32, i32
  }
}

</mosaic_0001>

<llo_original>
// kernel: chat_mlp_forward.1
$region0: #{chat_mlp_forward.1}
  #allocation0 [shape = 'u32[]', space=smem, size = 0x4, offset = 0x4, fixed_abs, tag = 'smem constant byte address 0x4 - core index']
  #allocation1 [shape = 'u32[144,128]{1,0:T(1,128)}', space=vmem, size = 0x12000, scoped, tag = 'internal scratch']
  %s0 = inlined_call_operand.vmem [shape: f32[64,32], index: 0, kind: input, shape index: {}]
  %s1 = inlined_call_operand.vmem [shape: f32[32,128], index: 1, kind: input, shape index: {}]
  %s2 = inlined_call_operand.vmem [shape: f32[1,128], index: 2, kind: input, shape index: {}]
  %s3 = inlined_call_operand.hbm [shape: f32[128,128], index: 3, kind: input, shape index: {}]
  %s4 = inlined_call_operand.vmem [shape: f32[1,128], index: 4, kind: input, shape index: {}]
  %s5 = inlined_call_operand.hbm [shape: f32[128,128], index: 5, kind: input, shape index: {}]
  %s6 = inlined_call_operand.vmem [shape: f32[1,128], index: 6, kind: input, shape index: {}]
  %s7 = inlined_call_operand.vmem [shape: f32[64,128], index: 7, kind: output, shape index: {}]
  %s8 = sld [smem:[#allocation0]]
  $region46: #{chat_mlp_forward.1} parent=0
    _
  %s10 = ssub.s32 1, %s8
  %s11 = scalar_select 0, %s10, %s8
  $region1: #{chat_mlp_forward.1} parent=0
    #allocation2 [shape = 'u8[65536]{0}', space=vmem, size = 0x10000, scoped, tag = 'input window, operand 3, single buffered']
    #allocation3 [shape = 's32[1]{0}', space=sflag, size = 0x4, scoped, tag = 'scoped memory for chat_mlp_forward.1']
    #allocation4 [shape = 'u8[65536]{0}', space=vmem, size = 0x10000, scoped, tag = 'input window, operand 5, single buffered']
    #allocation5 [shape = 's32[1]{0}', space=sflag, size = 0x4, scoped, tag = 'scoped memory for chat_mlp_forward.1']
    %12 = vsyncpa [#allocation3], 0
    %13 = vsyncpa [#allocation5], 0
    // Predicated region
    $region2: #{chat_mlp_forward.1} parent=1 // pred_check
      _
    $region3: #{chat_mlp_forward.1} parent=1 // pred_check_branch
      %15 = sbr.rel (0) target = $region5
    $region4: #{chat_mlp_forward.1} parent=1 // pred_region
      _
    $region5: #{chat_mlp_forward.1} parent=1 // pred_fallthru
      _
    // Predicated region
    $region6: #{chat_mlp_forward.1} parent=1 // pred_check
      _
    $region7: #{chat_mlp_forward.1} parent=1 // pred_check_branch
      %17 = sbr.rel (0) target = $region9
    $region8: #{chat_mlp_forward.1} parent=1 // pred_region
      _
    $region9: #{chat_mlp_forward.1} parent=1 // pred_fallthru
      _
    // Predicated region
    $region10: #{chat_mlp_forward.1} parent=1 // pred_check
      _
    $region11: #{chat_mlp_forward.1} parent=1 // pred_check_branch
      %19 = sbr.rel (0) target = $region13
    $region12: #{chat_mlp_forward.1} parent=1 // pred_region
      _
    $region13: #{chat_mlp_forward.1} parent=1 // pred_fallthru
      _
    // Predicated region
    $region14: #{chat_mlp_forward.1} parent=1 // pred_check
      _
    $region15: #{chat_mlp_forward.1} parent=1 // pred_check_branch
      %21 = sbr.rel (0) target = $region17
    $region16: #{chat_mlp_forward.1} parent=1 // pred_region
      %s23 = ssub.s32 2048, 2048
      %24 = vsyncadd [#allocation3], %s23
      %s25 = sshll.u32 [#allocation2], 4
      %s26 = int_to_ptr.vmem [resolvable:$true] %s25
      %31 = dma.hbm_to_vmem [thread:$0]  %s3, 2048, %s26, [#allocation3], 128, 128, 8
    $region17: #{chat_mlp_forward.1} parent=1 // pred_fallthru
      _
    // Predicated region
    $region18: #{chat_mlp_forward.1} parent=1 // pred_check
      _
    $region19: #{chat_mlp_forward.1} parent=1 // pred_check_branch
      %33 = sbr.rel (0) target = $region21
    $region20: #{chat_mlp_forward.1} parent=1 // pred_region
      _
    $region21: #{chat_mlp_forward.1} parent=1 // pred_fallthru
      _
    // Predicated region
    $region22: #{chat_mlp_forward.1} parent=1 // pred_check
      _
    $region23: #{chat_mlp_forward.1} parent=1 // pred_check_branch
      %35 = sbr.rel (0) target = $region25
    $region24: #{chat_mlp_forward.1} parent=1 // pred_region
      %s37 = ssub.s32 2048, 2048
      %38 = vsyncadd [#allocation5], %s37
      %s39 = sshll.u32 [#allocation4], 4
      %s40 = int_to_ptr.vmem [resolvable:$true] %s39
      %45 = dma.hbm_to_vmem [thread:$0]  %s5, 2048, %s40, [#allocation5], 128, 128, 8
    $region25: #{chat_mlp_forward.1} parent=1 // pred_fallthru
      _
    // Predicated region
    $region26: #{chat_mlp_forward.1} parent=1 // pred_check
      _
    $region27: #{chat_mlp_forward.1} parent=1 // pred_check_branch
      %47 = sbr.rel (0) target = $region29
    $region28: #{chat_mlp_forward.1} parent=1 // pred_region
      _
    $region29: #{chat_mlp_forward.1} parent=1 // pred_fallthru
      _
    // Predicated region
    $region30: #{chat_mlp_forward.1} parent=1 // pred_check
      _
    $region31: #{chat_mlp_forward.1} parent=1 // pred_check_branch
      %49 = sbr.rel (0) target = $region33
    $region32: #{chat_mlp_forward.1} parent=1 // pred_region
      %50 = dma.done [#allocation3], 2048
    $region33: #{chat_mlp_forward.1} parent=1 // pred_fallthru
      _
    // Predicated region
    $region34: #{chat_mlp_forward.1} parent=1 // pred_check
      _
    $region35: #{chat_mlp_forward.1} parent=1 // pred_check_branch
      %52 = sbr.rel (0) target = $region37
    $region36: #{chat_mlp_forward.1} parent=1 // pred_region
      %53 = dma.done [#allocation5], 2048
    $region37: #{chat_mlp_forward.1} parent=1 // pred_fallthru
      _
    %v54 = vld [vmem:[%s0] sm:$0xff]
    %v55 = vld [vmem:[%s0 + $0x8] sm:$0xff]
    %v56 = vld [vmem:[%s0 + $0x10] sm:$0xff]
    %v57 = vld [vmem:[%s0 + $0x18] sm:$0xff]
    %v58 = vld [vmem:[%s0 + $0x20] sm:$0xff]
    %v59 = vld [vmem:[%s0 + $0x28] sm:$0xff]
    %v60 = vld [vmem:[%s0 + $0x30] sm:$0xff]
    %v61 = vld [vmem:[%s0 + $0x38] sm:$0xff]
    %v62 = vld [vmem:[%s1] sm:$0xff]
    %v63 = vld [vmem:[%s1 + $0x8] sm:$0xff]
    %v64 = vld [vmem:[%s1 + $0x10] sm:$0xff]
    %v65 = vld [vmem:[%s1 + $0x18] sm:$0xff]
    %v66 = vld [vmem:[%s2] sm:$0x1]
    %v68 = vlaneseq
    %v69 = vshrl.u32 %v68, 7
    %v70 = vsub.s32 0, %v69
    %v71 = vrot.slane %v66, %v70
    %vm73 = vcmask 261120
    %v75 = vsel %vm73, %v54, 0
    %v78 = vsel %vm73, %v55, 0
    %v81 = vsel %vm73, %v56, 0
    %v84 = vsel %vm73, %v57, 0
    %v87 = vsel %vm73, %v58, 0
    %v90 = vsel %vm73, %v59, 0
    %v93 = vsel %vm73, %v60, 0
    %v96 = vsel %vm73, %v61, 0
    %98 = vmatprep.subr.mxu0 0.0
    %99 = vmatpush1.msra.mxu0 %v62
    %100 = vmatprep.subr.mxu0 0.0
    %101 = vmatpush1.msra.mxu0 %v63
    %102 = vmatprep.subr.mxu0 0.0
    %103 = vmatpush1.msra.mxu0 %v64
    %104 = vmatprep.subr.mxu0 0.0
    %105 = vmatpush1.msra.mxu0 %v65
    %106 = vmatprep.subr.mxu0 0.0
    %107 = vmatpush1.msra.mxu0 0.0
    %108 = vmatprep.subr.mxu0 0.0
    %109 = vmatpush1.msra.mxu0 0.0
    %110 = vmatprep.subr.mxu0 0.0
    %111 = vmatpush1.msra.mxu0 0.0
    %112 = vmatprep.subr.mxu0 0.0
    %113 = vmatpush1.msra.mxu0 0.0
    %114 = vmatprep.subr.mxu0 0.0
    %115 = vmatpush1.msra.mxu0 0.0
    %116 = vmatprep.subr.mxu0 0.0
    %117 = vmatpush1.msra.mxu0 0.0
    %118 = vmatprep.subr.mxu0 0.0
    %119 = vmatpush1.msra.mxu0 0.0
    %120 = vmatprep.subr.mxu0 0.0
    %121 = vmatpush1.msra.mxu0 0.0
    %122 = vmatprep.subr.mxu0 0.0
    %123 = vmatpush1.msra.mxu0 0.0
    %124 = vmatprep.subr.mxu0 0.0
    %125 = vmatpush1.msra.mxu0 0.0
    %126 = vmatprep.subr.mxu0 0.0
    %127 = vmatpush1.msra.mxu0 0.0
    %128 = vmatprep.subr.mxu0 0.0
    %129 = vmatpush1.msra.mxu0 0.0
    %130 = vmatprep.subr.mxu0 0.0
    %131 = vmatpush1.msra.mxu0 0.0
    %132 = vmatprep.subr.mxu0 0.0
    %133 = vmatpush1.msra.mxu0 0.0
    %134 = vmatprep.subr.mxu0 0.0
    %135 = vmatpush1.msra.mxu0 0.0
    %136 = vmatprep.subr.mxu0 0.0
    %137 = vmatpush1.msra.mxu0 0.0
    %138 = vmatprep.subr.mxu0 0.0
    %139 = vmatpush1.msra.mxu0 0.0
    %140 = vmatprep.subr.mxu0 0.0
    %141 = vmatpush1.msra.mxu0 0.0
    %142 = vmatprep.subr.mxu0 0.0
    %143 = vmatpush1.msra.mxu0 0.0
    %144 = vmatprep.subr.mxu0 0.0
    %145 = vmatpush1.msra.mxu0 0.0
    %146 = vmatprep.subr.mxu0 0.0
    %147 = vmatpush1.msra.mxu0 0.0
    %148 = vmatprep.subr.mxu0 0.0
    %149 = vmatpush1.msra.mxu0 0.0
    %150 = vmatprep.subr.mxu0 0.0
    %151 = vmatpush1.msra.mxu0 0.0
    %152 = vmatprep.subr.mxu0 0.0
    %153 = vmatpush1.msra.mxu0 0.0
    %154 = vmatprep.subr.mxu0 0.0
    %155 = vmatpush1.msra.mxu0 0.0
    %156 = vmatprep.subr.mxu0 0.0
    %157 = vmatpush1.msra.mxu0 0.0
    %158 = vmatprep.subr.mxu0 0.0
    %159 = vmatpush1.msra.mxu0 0.0
    %160 = vmatprep.subr.mxu0 0.0
    %161 = vmatpush1.msra.mxu0 0.0
    %162 = vmatprep.mubr.f32.mxu0 0.0
    %163 = vmatmul.mubr.f32.gmra.mrb[0].mxu0 %v75
    %v164 = vpop.f32.mrb[0].mxu0
    %v165 = vadd.f32 %v71, %v164
    %v166 = vpop.f32.mrb[0].mxu0
    %167 = vmatprep.mubr.f32.mxu0 0.0
    %168 = vmatmul.mubr.f32.gmra.mrb[0].mxu0 %v78
    %v169 = vpop.f32.mrb[0].mxu0
    %v170 = vadd.f32 %v71, %v169
    %v171 = vpop.f32.mrb[0].mxu0
    %172 = vmatprep.mubr.f32.mxu0 0.0
    %173 = vmatmul.mubr.f32.gmra.mrb[0].mxu0 %v81
    %v174 = vpop.f32.mrb[0].mxu0
    %v175 = vadd.f32 %v71, %v174
    %v176 = vpop.f32.mrb[0].mxu0
    %177 = vmatprep.mubr.f32.mxu0 0.0
    %178 = vmatmul.mubr.f32.gmra.mrb[0].mxu0 %v84
    %v179 = vpop.f32.mrb[0].mxu0
    %v180 = vadd.f32 %v71, %v179
    %v181 = vpop.f32.mrb[0].mxu0
    %182 = vmatprep.mubr.f32.mxu0 0.0
    %183 = vmatmul.mubr.f32.gmra.mrb[0].mxu0 %v87
    %v184 = vpop.f32.mrb[0].mxu0
    %v185 = vadd.f32 %v71, %v184
    %v186 = vpop.f32.mrb[0].mxu0
    %187 = vmatprep.mubr.f32.mxu0 0.0
    %188 = vmatmul.mubr.f32.gmra.mrb[0].mxu0 %v90
    %v189 = vpop.f32.mrb[0].mxu0
    %v190 = vadd.f32 %v71, %v189
    %v191 = vpop.f32.mrb[0].mxu0
    %192 = vmatprep.mubr.f32.mxu0 0.0
    %193 = vmatmul.mubr.f32.gmra.mrb[0].mxu0 %v93
    %v194 = vpop.f32.mrb[0].mxu0
    %v195 = vadd.f32 %v71, %v194
    %v196 = vpop.f32.mrb[0].mxu0
    %197 = vmatprep.mubr.f32.mxu0 0.0
    %198 = vmatmul.mubr.f32.gmra.mrb[0].mxu0 %v96
    %v199 = vpop.f32.mrb[0].mxu0
    %v200 = vadd.f32 %v71, %v199
    %v201 = vpop.f32.mrb[0].mxu0
    %202 = vdwg.mxu0
    %v203 = vmax.f32 %v165, 0.0
    %v204 = vmax.f32 %v170, 0.0
    %v205 = vmax.f32 %v175, 0.0
    %v206 = vmax.f32 %v180, 0.0
    %v207 = vmax.f32 %v185, 0.0
    %v208 = vmax.f32 %v190, 0.0
    %v209 = vmax.f32 %v195, 0.0
    %v210 = vmax.f32 %v200, 0.0
    %v211 = vld [vmem:[#allocation2] sm:$0xff]
    %v212 = vld [vmem:[#allocation2 + $0x8] sm:$0xff]
    %v213 = vld [vmem:[#allocation2 + $0x10] sm:$0xff]
    %v214 = vld [vmem:[#allocation2 + $0x18] sm:$0xff]
    %v215 = vld [vmem:[#allocation2 + $0x20] sm:$0xff]
    %v216 = vld [vmem:[#allocation2 + $0x28] sm:$0xff]
    %v217 = vld [vmem:[#allocation2 + $0x30] sm:$0xff]
    %v218 = vld [vmem:[#allocation2 + $0x38] sm:$0xff]
    %v219 = vld [vmem:[#allocation2 + $0x40] sm:$0xff]
    %v220 = vld [vmem:[#allocation2 + $0x48] sm:$0xff]
    %v221 = vld [vmem:[#allocation2 + $0x50] sm:$0xff]
    %v222 = vld [vmem:[#allocation2 + $0x58] sm:$0xff]
    %v223 = vld [vmem:[#allocation2 + $0x60] sm:$0xff]
    %v224 = vld [vmem:[#allocation2 + $0x68] sm:$0xff]
    %v225 = vld [vmem:[#allocation2 + $0x70] sm:$0xff]
    %v226 = vld [vmem:[#allocation2 + $0x78] sm:$0xff]
    %v227 = vld [vmem:[%s4] sm:$0x1]
    %v229 = vlaneseq
    %v230 = vshrl.u32 %v229, 7
    %v231 = vsub.s32 0, %v230
    %v232 = vrot.slane %v227, %v231
    %234 = vmatprep.subr.mxu0 0.0
    %235 = vmatpush1.msra.mxu0 %v211
    %236 = vmatprep.subr.mxu0 0.0
    %237 = vmatpush1.msra.mxu0 %v212
    %238 = vmatprep.subr.mxu0 0.0
    %239 = vmatpush1.msra.mxu0 %v213
    %240 = vmatprep.subr.mxu0 0.0
    %241 = vmatpush1.msra.mxu0 %v214
    %242 = vmatprep.subr.mxu0 0.0
    %243 = vmatpush1.msra.mxu0 %v215
    %244 = vmatprep.subr.mxu0 0.0
    %245 = vmatpush1.msra.mxu0 %v216
    %246 = vmatprep.subr.mxu0 0.0
    %247 = vmatpush1.msra.mxu0 %v217
    %248 = vmatprep.subr.mxu0 0.0
    %249 = vmatpush1.msra.mxu0 %v218
    %250 = vmatprep.subr.mxu0 0.0
    %251 = vmatpush1.msra.mxu0 %v219
    %252 = vmatprep.subr.mxu0 0.0
    %253 = vmatpush1.msra.mxu0 %v220
    %254 = vmatprep.subr.mxu0 0.0
    %255 = vmatpush1.msra.mxu0 %v221
    %256 = vmatprep.subr.mxu0 0.0
    %257 = vmatpush1.msra.mxu0 %v222
    %258 = vmatprep.subr.mxu0 0.0
    %259 = vmatpush1.msra.mxu0 %v223
    %260 = vmatprep.subr.mxu0 0.0
    %261 = vmatpush1.msra.mxu0 %v224
    %262 = vmatprep.subr.mxu0 0.0
    %263 = vmatpush1.msra.mxu0 %v225
    %264 = vmatprep.subr.mxu0 0.0
    %265 = vmatpush1.msra.mxu0 %v226
    %266 = vmatprep.subr.mxu0 0.0
    %267 = vmatpush1.msra.mxu0 0.0
    %268 = vmatprep.subr.mxu0 0.0
    %269 = vmatpush1.msra.mxu0 0.0
    %270 = vmatprep.subr.mxu0 0.0
    %271 = vmatpush1.msra.mxu0 0.0
    %272 = vmatprep.subr.mxu0 0.0
    %273 = vmatpush1.msra.mxu0 0.0
    %274 = vmatprep.subr.mxu0 0.0
    %275 = vmatpush1.msra.mxu0 0.0
    %276 = vmatprep.subr.mxu0 0.0
    %277 = vmatpush1.msra.mxu0 0.0
    %278 = vmatprep.subr.mxu0 0.0
    %279 = vmatpush1.msra.mxu0 0.0
    %280 = vmatprep.subr.mxu0 0.0
    %281 = vmatpush1.msra.mxu0 0.0
    %282 = vmatprep.subr.mxu0 0.0
    %283 = vmatpush1.msra.mxu0 0.0
    %284 = vmatprep.subr.mxu0 0.0
    %285 = vmatpush1.msra.mxu0 0.0
    %286 = vmatprep.subr.mxu0 0.0
    %287 = vmatpush1.msra.mxu0 0.0
    %288 = vmatprep.subr.mxu0 0.0
    %289 = vmatpush1.msra.mxu0 0.0
    %290 = vmatprep.subr.mxu0 0.0
    %291 = vmatpush1.msra.mxu0 0.0
    %292 = vmatprep.subr.mxu0 0.0
    %293 = vmatpush1.msra.mxu0 0.0
    %294 = vmatprep.subr.mxu0 0.0
    %295 = vmatpush1.msra.mxu0 0.0
    %296 = vmatprep.subr.mxu0 0.0
    %297 = vmatpush1.msra.mxu0 0.0
    %298 = vmatprep.mubr.f32.mxu0 0.0
    %299 = vmatmul.mubr.f32.gmra.mrb[0].mxu0 %v203
    %v300 = vpop.f32.mrb[0].mxu0
    %v301 = vadd.f32 %v232, %v300
    %v302 = vpop.f32.mrb[0].mxu0
    %303 = vmatprep.mubr.f32.mxu0 0.0
    %304 = vmatmul.mubr.f32.gmra.mrb[0].mxu0 %v204
    %v305 = vpop.f32.mrb[0].mxu0
    %v306 = vadd.f32 %v232, %v305
    %v307 = vpop.f32.mrb[0].mxu0
    %308 = vmatprep.mubr.f32.mxu0 0.0
    %309 = vmatmul.mubr.f32.gmra.mrb[0].mxu0 %v205
    %v310 = vpop.f32.mrb[0].mxu0
    %v311 = vadd.f32 %v232, %v310
    %v312 = vpop.f32.mrb[0].mxu0
    %313 = vmatprep.mubr.f32.mxu0 0.0
    %314 = vmatmul.mubr.f32.gmra.mrb[0].mxu0 %v206
    %v315 = vpop.f32.mrb[0].mxu0
    %v316 = vadd.f32 %v232, %v315
    %v317 = vpop.f32.mrb[0].mxu0
    %318 = vmatprep.mubr.f32.mxu0 0.0
    %319 = vmatmul.mubr.f32.gmra.mrb[0].mxu0 %v207
    %v320 = vpop.f32.mrb[0].mxu0
    %v321 = vadd.f32 %v232, %v320
    %v322 = vpop.f32.mrb[0].mxu0
    %323 = vmatprep.mubr.f32.mxu0 0.0
    %324 = vmatmul.mubr.f32.gmra.mrb[0].mxu0 %v208
    %v325 = vpop.f32.mrb[0].mxu0
    %v326 = vadd.f32 %v232, %v325
    %v327 = vpop.f32.mrb[0].mxu0
    %328 = vmatprep.mubr.f32.mxu0 0.0
    %329 = vmatmul.mubr.f32.gmra.mrb[0].mxu0 %v209
    %v330 = vpop.f32.mrb[0].mxu0
    %v331 = vadd.f32 %v232, %v330
    %v332 = vpop.f32.mrb[0].mxu0
    %333 = vmatprep.mubr.f32.mxu0 0.0
    %334 = vmatmul.mubr.f32.gmra.mrb[0].mxu0 %v210
    %v335 = vpop.f32.mrb[0].mxu0
    %v336 = vadd.f32 %v232, %v335
    %v337 = vpop.f32.mrb[0].mxu0
    %338 = vdwg.mxu0
    %v339 = vmax.f32 %v301, 0.0
    %v340 = vmax.f32 %v306, 0.0
    %v341 = vmax.f32 %v311, 0.0
    %v342 = vmax.f32 %v316, 0.0
    %v343 = vmax.f32 %v321, 0.0
    %v344 = vmax.f32 %v326, 0.0
    %v345 = vmax.f32 %v331, 0.0
    %v346 = vmax.f32 %v336, 0.0
    %v347 = vld [vmem:[#allocation4] sm:$0xff]
    %v348 = vld [vmem:[#allocation4 + $0x8] sm:$0xff]
    %v349 = vld [vmem:[#allocation4 + $0x10] sm:$0xff]
    %v350 = vld [vmem:[#allocation4 + $0x18] sm:$0xff]
    %v351 = vld [vmem:[#allocation4 + $0x20] sm:$0xff]
    %v352 = vld [vmem:[#allocation4 + $0x28] sm:$0xff]
    %v353 = vld [vmem:[#allocation4 + $0x30] sm:$0xff]
    %v354 = vld [vmem:[#allocation4 + $0x38] sm:$0xff]
    %v355 = vld [vmem:[#allocation4 + $0x40] sm:$0xff]
    %v356 = vld [vmem:[#allocation4 + $0x48] sm:$0xff]
    %v357 = vld [vmem:[#allocation4 + $0x50] sm:$0xff]
    %v358 = vld [vmem:[#allocation4 + $0x58] sm:$0xff]
    %v359 = vld [vmem:[#allocation4 + $0x60] sm:$0xff]
    %v360 = vld [vmem:[#allocation4 + $0x68] sm:$0xff]
    %v361 = vld [vmem:[#allocation4 + $0x70] sm:$0xff]
    %v362 = vld [vmem:[#allocation4 + $0x78] sm:$0xff]
    %v363 = vld [vmem:[%s6] sm:$0x1]
    %v365 = vlaneseq
    %v366 = vshrl.u32 %v365, 7
    %v367 = vsub.s32 0, %v366
    %v368 = vrot.slane %v363, %v367
    %370 = vmatprep.subr.mxu0 0.0
    %371 = vmatpush1.msra.mxu0 %v347
    %372 = vmatprep.subr.mxu0 0.0
    %373 = vmatpush1.msra.mxu0 %v348
    %374 = vmatprep.subr.mxu0 0.0
    %375 = vmatpush1.msra.mxu0 %v349
    %376 = vmatprep.subr.mxu0 0.0
    %377 = vmatpush1.msra.mxu0 %v350
    %378 = vmatprep.subr.mxu0 0.0
    %379 = vmatpush1.msra.mxu0 %v351
    %380 = vmatprep.subr.mxu0 0.0
    %381 = vmatpush1.msra.mxu0 %v352
    %382 = vmatprep.subr.mxu0 0.0
    %383 = vmatpush1.msra.mxu0 %v353
    %384 = vmatprep.subr.mxu0 0.0
    %385 = vmatpush1.msra.mxu0 %v354
    %386 = vmatprep.subr.mxu0 0.0
    %387 = vmatpush1.msra.mxu0 %v355
    %388 = vmatprep.subr.mxu0 0.0
    %389 = vmatpush1.msra.mxu0 %v356
    %390 = vmatprep.subr.mxu0 0.0
    %391 = vmatpush1.msra.mxu0 %v357
    %392 = vmatprep.subr.mxu0 0.0
    %393 = vmatpush1.msra.mxu0 %v358
    %394 = vmatprep.subr.mxu0 0.0
    %395 = vmatpush1.msra.mxu0 %v359
    %396 = vmatprep.subr.mxu0 0.0
    %397 = vmatpush1.msra.mxu0 %v360
    %398 = vmatprep.subr.mxu0 0.0
    %399 = vmatpush1.msra.mxu0 %v361
    %400 = vmatprep.subr.mxu0 0.0
    %401 = vmatpush1.msra.mxu0 %v362
    %402 = vmatprep.subr.mxu0 0.0
    %403 = vmatpush1.msra.mxu0 0.0
    %404 = vmatprep.subr.mxu0 0.0
    %405 = vmatpush1.msra.mxu0 0.0
    %406 = vmatprep.subr.mxu0 0.0
    %407 = vmatpush1.msra.mxu0 0.0
    %408 = vmatprep.subr.mxu0 0.0
    %409 = vmatpush1.msra.mxu0 0.0
    %410 = vmatprep.subr.mxu0 0.0
    %411 = vmatpush1.msra.mxu0 0.0
    %412 = vmatprep.subr.mxu0 0.0
    %413 = vmatpush1.msra.mxu0 0.0
    %414 = vmatprep.subr.mxu0 0.0
    %415 = vmatpush1.msra.mxu0 0.0
    %416 = vmatprep.subr.mxu0 0.0
    %417 = vmatpush1.msra.mxu0 0.0
    %418 = vmatprep.subr.mxu0 0.0
    %419 = vmatpush1.msra.mxu0 0.0
    %420 = vmatprep.subr.mxu0 0.0
    %421 = vmatpush1.msra.mxu0 0.0
    %422 = vmatprep.subr.mxu0 0.0
    %423 = vmatpush1.msra.mxu0 0.0
    %424 = vmatprep.subr.mxu0 0.0
    %425 = vmatpush1.msra.mxu0 0.0
    %426 = vmatprep.subr.mxu0 0.0
    %427 = vmatpush1.msra.mxu0 0.0
    %428 = vmatprep.subr.mxu0 0.0
    %429 = vmatpush1.msra.mxu0 0.0
    %430 = vmatprep.subr.mxu0 0.0
    %431 = vmatpush1.msra.mxu0 0.0
    %432 = vmatprep.subr.mxu0 0.0
    %433 = vmatpush1.msra.mxu0 0.0
    %434 = vmatprep.mubr.f32.mxu0 0.0
    %435 = vmatmul.mubr.f32.gmra.mrb[0].mxu0 %v339
    %v436 = vpop.f32.mrb[0].mxu0
    %v437 = vadd.f32 %v368, %v436
    %v438 = vpop.f32.mrb[0].mxu0
    %439 = vmatprep.mubr.f32.mxu0 0.0
    %440 = vmatmul.mubr.f32.gmra.mrb[0].mxu0 %v340
    %v441 = vpop.f32.mrb[0].mxu0
    %v442 = vadd.f32 %v368, %v441
    %v443 = vpop.f32.mrb[0].mxu0
    %444 = vmatprep.mubr.f32.mxu0 0.0
    %445 = vmatmul.mubr.f32.gmra.mrb[0].mxu0 %v341
    %v446 = vpop.f32.mrb[0].mxu0
    %v447 = vadd.f32 %v368, %v446
    %v448 = vpop.f32.mrb[0].mxu0
    %449 = vmatprep.mubr.f32.mxu0 0.0
    %450 = vmatmul.mubr.f32.gmra.mrb[0].mxu0 %v342
    %v451 = vpop.f32.mrb[0].mxu0
    %v452 = vadd.f32 %v368, %v451
    %v453 = vpop.f32.mrb[0].mxu0
    %454 = vmatprep.mubr.f32.mxu0 0.0
    %455 = vmatmul.mubr.f32.gmra.mrb[0].mxu0 %v343
    %v456 = vpop.f32.mrb[0].mxu0
    %v457 = vadd.f32 %v368, %v456
    %v458 = vpop.f32.mrb[0].mxu0
    %459 = vmatprep.mubr.f32.mxu0 0.0
    %460 = vmatmul.mubr.f32.gmra.mrb[0].mxu0 %v344
    %v461 = vpop.f32.mrb[0].mxu0
    %v462 = vadd.f32 %v368, %v461
    %v463 = vpop.f32.mrb[0].mxu0
    %464 = vmatprep.mubr.f32.mxu0 0.0
    %465 = vmatmul.mubr.f32.gmra.mrb[0].mxu0 %v345
    %v466 = vpop.f32.mrb[0].mxu0
    %v467 = vadd.f32 %v368, %v466
    %v468 = vpop.f32.mrb[0].mxu0
    %469 = vmatprep.mubr.f32.mxu0 0.0
    %470 = vmatmul.mubr.f32.gmra.mrb[0].mxu0 %v346
    %v471 = vpop.f32.mrb[0].mxu0
    %v472 = vadd.f32 %v368, %v471
    %v473 = vpop.f32.mrb[0].mxu0
    %474 = vdwg.mxu0
    %475 = vst [vmem:[%s7] sm:$0xff] %v437
    %476 = vst [vmem:[%s7 + $0x8] sm:$0xff] %v442
    %477 = vst [vmem:[%s7 + $0x10] sm:$0xff] %v447
    %478 = vst [vmem:[%s7 + $0x18] sm:$0xff] %v452
    %479 = vst [vmem:[%s7 + $0x20] sm:$0xff] %v457
    %480 = vst [vmem:[%s7 + $0x28] sm:$0xff] %v462
    %481 = vst [vmem:[%s7 + $0x30] sm:$0xff] %v467
    %482 = vst [vmem:[%s7 + $0x38] sm:$0xff] %v472
    // Predicated region
    $region38: #{chat_mlp_forward.1} parent=1 // pred_check
      _
    $region39: #{chat_mlp_forward.1} parent=1 // pred_check_branch
      %484 = sbr.rel (0) target = $region41
    $region40: #{chat_mlp_forward.1} parent=1 // pred_region
      _
    $region41: #{chat_mlp_forward.1} parent=1 // pred_fallthru
      _
    // Predicated region
    $region42: #{chat_mlp_forward.1} parent=1 // pred_check
      _
    $region43: #{chat_mlp_forward.1} parent=1 // pred_check_branch
      %486 = sbr.rel (0) target = $region45
    $region44: #{chat_mlp_forward.1} parent=1 // pred_region
      _
    $region45: #{chat_mlp_forward.1} parent=1 // pred_fallthru
      _
    %487 = vsyncpa [#allocation3], 1
    %488 = vsyncpa [#allocation5], 1

</llo_original>
